<compile_context>
chip_gen: v7x
topology: tpu7x:2x2x1
jax: 0.10.0
libtpu: 0.0.40
codegen_flags: <defaults>
</compile_context>

<pallas_src>
import math

import numpy as np
import jax
import jax.numpy as jnp
from jax import lax
from jax.experimental import pallas as pl
from jax.experimental.pallas import tpu as pltpu

BN_EPS = 1e-5                     # PyTorch BatchNorm1d default
TARGET_BLOCK_LANES = 4096         # aim for 2K-8K lanes per grid step (per-step overhead amortization)
VMEM_BUDGET = 10 * 1024 * 1024    # per-block activation budget; safe under v5e's 16 MiB scoped default


def _round_up(v, m):
    return ((v + m - 1) // m) * m


def _cdiv(a, b):
    return -(-a // b)


# ----------------------------- Pallas kernel -----------------------------------------

def build_kernel(*, ci_p, co_p, K, shifts, shift_row, nbl, fuse_ds, sep_ds):
    """ci_p/co_p already padded to multiples of 8; nbl = samples_per_block * L (mult of 128)."""

    def make_taps(h, M):
        # Build the K shifted views with XLU rotates + boundary masks; concatenate on the
        # sublane axis so each conv is ONE fused MXU matmul over the (K*C) contraction dim.
        parts = []
        for s in shifts:
            if s == 0:
                parts.append(h)
            else:
                rolled = pltpu.roll(h, (-s) % nbl, 1)          # rolled[t] = h[t + s] (wraps)
                r = shift_row[s]
                parts.append(rolled * M[r:r + 1, :])           # zero wrap/cross-sample taps
        return jnp.concatenate(parts, axis=0)                  # (K*C, nbl), 8-aligned blocks

    def kernel(*refs):
        if sep_ds:
            (x_ref, w1_ref, b1_ref, w2_ref, b2_ref, m_ref,
             wds_ref, bds_ref, o_ref) = refs
        else:
            x_ref, w1_ref, b1_ref, w2_ref, b2_ref, m_ref, o_ref = refs

        x = x_ref[...]                                         # (ci_p, nbl) f32, batch on lanes
        M = m_ref[...]                                         # (n_masks, nbl)

        # conv1 (+ folded bn1) [+ fused 1x1 downsample rows] in one MXU matmul.
        r1 = jnp.dot(w1_ref[...], make_taps(x, M),
                     preferred_element_type=jnp.float32) + b1_ref[...]
        if fuse_ds:
            o1 = jnp.maximum(r1[:co_p], 0.0)                   # conv1 rows: relu (+dropout1 = id)
            residual = r1[co_p:]                               # downsample rows: no relu
        else:
            o1 = jnp.maximum(r1, 0.0)
            if sep_ds:
                residual = jnp.dot(wds_ref[...], x,
                                   preferred_element_type=jnp.float32) + bds_ref[...]
            else:
                residual = x                                   # ci == co in this case

        # conv2 + folded bn2 + relu2 (+dropout2 = id).
        o2 = jnp.maximum(
            jnp.dot(w2_ref[...], make_taps(o1, M),
                    preferred_element_type=jnp.float32) + b2_ref[...], 0.0)

        o_ref[...] = (o2 + residual).astype(o_ref.dtype)       # lane-dense store; trim in wrapper

    return kernel


# ----------------------------- blocking / wrapper --------------------------------------

def _choose_blocking(N, L, ci_p, co_p, K):
    nb_unit = 128 // math.gcd(L, 128)            # samples per 128-lane unit (nb*L % 128 == 0)
    unit_lanes = nb_unit * L
    total_units = _cdiv(max(N, 1), nb_unit)
    # f32 bytes per lane in flight: double-buffered x & out, both tap stacks, matmul temps.
    bytes_per_lane = 4 * (2 * ci_p + 2 * co_p + K * (ci_p + co_p) + 5 * co_p)
    max_units_vmem = max(1, VMEM_BUDGET // (bytes_per_lane * unit_lanes))
    want_units = max(1, TARGET_BLOCK_LANES // unit_lanes)
    units_per_block = max(1, min(max_units_vmem, want_units, total_units))
    n_blocks = _cdiv(total_units, units_per_block)
    if n_blocks > 1 and n_blocks % 2 == 1:
        n_blocks += 1                            # even grid so v7x's two TCs both get work
    nb = units_per_block * nb_unit
    npad = n_blocks * nb
    return nb, npad, n_blocks, bytes_per_lane


def tcnn_block_forward(x, params, *, kernel_size=3, dilation=1):
    N, ci, L = x.shape
    K = kernel_size
    pad = (K - 1) * dilation // 2
    co = params["w1"].shape[0]
    has_ds = params.get("ds_w") is not None

    shifts = [k * dilation - pad for k in range(K)]
    fuse_ds = has_ds and (0 in shifts)           # fold 1x1 downsample into conv1's center tap
    sep_ds = has_ds and not fuse_ds

    # ---- fold eval-mode BatchNorm into the conv weights / bias (host side) -------------
    def fold_bn(w, b, gamma, beta, mean, var):
        scale = gamma * lax.rsqrt(var + BN_EPS)
        return w * scale[:, None, None], (b - mean) * scale + beta

    w1f, b1f = fold_bn(params["w1"], params["b1"], params["g1"], params["be1"],
                       params["m1"], params["v1"])
    w2f, b2f = fold_bn(params["w2"], params["b2"], params["g2"], params["be2"],
                       params["m2"], params["v2"])

    # ---- pad channel dims to multiples of 8 so all in-kernel concats are tile-aligned --
    ci_p, co_p = _round_up(ci, 8), _round_up(co, 8)

    def pad_w(w, cop, cip):                      # (co, cin, K) -> (cop, cip, K)
        return jnp.pad(w, ((0, cop - w.shape[0]), (0, cip - w.shape[1]), (0, 0)))

    def pad_b(b, cop):
        return jnp.pad(b, (0, cop - b.shape[0]))

    # Flatten taps so each conv is a single matmul: W_flat[:, k*C + c] = w[:, c, k].
    W1 = jnp.transpose(pad_w(w1f, co_p, ci_p), (0, 2, 1)).reshape(co_p, K * ci_p)
    W2 = jnp.transpose(pad_w(w2f, co_p, co_p), (0, 2, 1)).reshape(co_p, K * co_p)
    b1v = pad_b(b1f, co_p)
    b2v = pad_b(b2f, co_p)

    if fuse_ds:
        # Append downsample weights as extra output rows, living in the center-tap columns.
        k0 = shifts.index(0)
        wds = jnp.zeros((co_p, K * ci_p), jnp.float32)
        wds = wds.at[:co, k0 * ci_p:k0 * ci_p + ci].set(params["ds_w"][:, :, 0])
        W1 = jnp.concatenate([W1, wds], axis=0)                 # (2*co_p, K*ci_p)
        b1v = jnp.concatenate([b1v, pad_b(params["ds_b"], co_p)])

    # ---- block sizing against the VMEM budget / target lane width ----------------------
    nb, npad, n_blocks, bytes_per_lane = _choose_blocking(N, L, ci_p, co_p, K)
    nbl = nb * L

    xp = jnp.pad(x.astype(jnp.float32), ((0, npad - N), (0, ci_p - ci), (0, 0)))
    # TODO(synk): for stacked TCN layers keep activations in this packed (C, N*L) layout
    # across the whole stack (pack once / unpack once) to avoid per-layer HBM transposes.
    x_flat = jnp.transpose(xp, (1, 0, 2)).reshape(ci_p, npad * L)   # (ci_p, npad*L)

    # ---- host-precomputed boundary masks (one row per distinct nonzero tap shift) ------
    t = jnp.arange(nbl) % L
    mask_rows, shift_row = [], {}
    for s in shifts:
        if s != 0 and s not in shift_row:
            shift_row[s] = len(mask_rows)
            mask_rows.append(((t + s >= 0) & (t + s < L)).astype(jnp.float32))
    if not mask_rows:
        mask_rows.append(jnp.ones((nbl,), jnp.float32))
    M_pack = jnp.stack(mask_rows)                                   # (n_masks, nbl)

    W1 = W1.astype(jnp.float32)
    W2 = W2.astype(jnp.float32)
    B1 = b1v.astype(jnp.float32)[:, None]
    B2 = b2v.astype(jnp.float32)[:, None]

    operands = [x_flat, W1, B1, W2, B2, M_pack]
    in_specs = [
        pl.BlockSpec((ci_p, nbl), lambda i: (0, i)),
        pl.BlockSpec(W1.shape, lambda i: (0, 0)),        # constant index -> fetched once
        pl.BlockSpec(B1.shape, lambda i: (0, 0)),
        pl.BlockSpec(W2.shape, lambda i: (0, 0)),
        pl.BlockSpec(B2.shape, lambda i: (0, 0)),
        pl.BlockSpec(M_pack.shape, lambda i: (0, 0)),
    ]
    if sep_ds:
        Wds = jnp.pad(params["ds_w"][:, :, 0],
                      ((0, co_p - co), (0, ci_p - ci))).astype(jnp.float32)
        Bds = pad_b(params["ds_b"], co_p).astype(jnp.float32)[:, None]
        operands += [Wds, Bds]
        in_specs += [pl.BlockSpec(Wds.shape, lambda i: (0, 0)),
                     pl.BlockSpec(Bds.shape, lambda i: (0, 0))]

    kernel = build_kernel(ci_p=ci_p, co_p=co_p, K=K, shifts=shifts, shift_row=shift_row,
                          nbl=nbl, fuse_ds=fuse_ds, sep_ds=sep_ds)

    # Explicit VMEM limit with headroom (defaults: 16 MiB v5e, 32 MiB v6e/v7x scoped).
    vmem_limit = int(min(64 * 1024 * 1024,
                         max(32 * 1024 * 1024, 2 * bytes_per_lane * nbl)))

    y_flat = pl.pallas_call(
        kernel,
        out_shape=jax.ShapeDtypeStruct((co_p, npad * L), jnp.float32),
        grid=(n_blocks,),
        in_specs=in_specs,
        out_specs=pl.BlockSpec((co_p, nbl), lambda i: (0, i)),
        compiler_params=pltpu.CompilerParams(
            dimension_semantics=("parallel",),   # v7x: shard batch blocks over both TCs
            vmem_limit_bytes=vmem_limit),
    )(*operands)

    y = jnp.transpose(y_flat.reshape(co_p, npad, L), (1, 0, 2))     # (npad, co_p, L)
    return y[:N, :co, : L - 2 * dilation]                           # chomp last 2*dilation


# ----------------------------- params & pure-JAX reference ---------------------------

def init_params(key, cin, cout, kernel_size):
    def nrm(k, shape, s=0.3):
        return jax.random.normal(k, shape, jnp.float32) * s

    ks = jax.random.split(key, 14)
    p = dict(
        w1=nrm(ks[0], (cout, cin, kernel_size)),
        b1=nrm(ks[1], (cout,), 0.1),
        g1=1.0 + nrm(ks[2], (cout,), 0.1),
        be1=nrm(ks[3], (cout,), 0.1),
        m1=nrm(ks[4], (cout,), 0.1),
        v1=0.9 + jnp.abs(nrm(ks[5], (cout,), 0.1)),
        w2=nrm(ks[6], (cout, cout, kernel_size)),
        b2=nrm(ks[7], (cout,), 0.1),
        g2=1.0 + nrm(ks[8], (cout,), 0.1),
        be2=nrm(ks[9], (cout,), 0.1),
        m2=nrm(ks[10], (cout,), 0.1),
        v2=0.9 + jnp.abs(nrm(ks[11], (cout,), 0.1)),
    )
    if cin != cout:
        p["ds_w"] = nrm(ks[12], (cout, cin, 1))
        p["ds_b"] = nrm(ks[13], (cout,), 0.1)
    else:
        p["ds_w"] = None
        p["ds_b"] = None
    return p


def ref_forward(x, p, *, kernel_size=3, dilation=1):
    pad = (kernel_size - 1) * dilation // 2

    def conv(h, w, b, dil, padding):
        y = lax.conv_general_dilated(
            h, w, window_strides=(1,), padding=[(padding, padding)],
            rhs_dilation=(dil,), dimension_numbers=("NCH", "OIH", "NCH"),
            precision=lax.Precision.HIGHEST)
        return y + b[None, :, None]

    def bn(h, g, be, m, v):
        return (h - m[None, :, None]) * (
            g[None, :, None] * lax.rsqrt(v[None, :, None] + BN_EPS)) + be[None, :, None]

    if p.get("ds_w") is not None:
        res = conv(x, p["ds_w"], p["ds_b"], 1, 0)
    else:
        res = x
    o = jax.nn.relu(bn(conv(x, p["w1"], p["b1"], dilation, pad),
                       p["g1"], p["be1"], p["m1"], p["v1"]))
    o = jax.nn.relu(bn(conv(o, p["w2"], p["b2"], dilation, pad),
                       p["g2"], p["be2"], p["m2"], p["v2"]))
    return (o + res)[:, :, : x.shape[-1] - 2 * dilation]


# ----------------------------- main ----------------------------------------------------

if __name__ == "__main__":
    key = jax.random.PRNGKey(0)
    kx, kp = jax.random.split(key)

    N, C_IN, C_OUT, L = 5, 4, 8, 32
    KSIZE, DIL = 3, 2

    x = jax.random.normal(kx, (N, C_IN, L), jnp.float32)
    params = init_params(kp, C_IN, C_OUT, KSIZE)

    out = tcnn_block_forward(x, params, kernel_size=KSIZE, dilation=DIL)
    out = jax.block_until_ready(out)

    ref = ref_forward(x, params, kernel_size=KSIZE, dilation=DIL)
    assert out.shape == (N, C_OUT, L - 2 * DIL), out.shape
    if not np.allclose(np.asarray(out), np.asarray(ref), rtol=2e-2, atol=2e-3):
        raise AssertionError(f"kernel/reference mismatch:\n{out}\n{ref}")
    print("KERNEL_OK")
</pallas_src>

<mosaic_0001>
module attributes {stable_mosaic.version = 11 : i64} {
  func.func @kernel(%arg0: i32, %arg1: memref<8x256xf32, #tpu.memory_space<vmem>>, %arg2: memref<16x24xf32, #tpu.memory_space<vmem>>, %arg3: memref<16x1xf32, #tpu.memory_space<vmem>>, %arg4: memref<8x24xf32, #tpu.memory_space<vmem>>, %arg5: memref<8x1xf32, #tpu.memory_space<vmem>>, %arg6: memref<2x256xf32, #tpu.memory_space<vmem>>, %arg7: memref<8x256xf32, #tpu.memory_space<vmem>>) attributes {dimension_semantics = [#tpu.dimension_semantics<parallel>], iteration_bounds = array<i64: 1>, scalar_prefetch = 0 : i64, scratch_operands = 0 : i64, tpu.core_type = #tpu.core_type<tc>, window_params = [{transform_indices = @transform_0, window_bounds = array<i64: 8, 256>}, {pipeline_mode = #tpu.pipeline_mode<synchronous>, transform_indices = @transform_1, window_bounds = array<i64: 16, 24>}, {pipeline_mode = #tpu.pipeline_mode<synchronous>, transform_indices = @transform_2, window_bounds = array<i64: 16, 1>}, {pipeline_mode = #tpu.pipeline_mode<synchronous>, transform_indices = @transform_3, window_bounds = array<i64: 8, 24>}, {pipeline_mode = #tpu.pipeline_mode<synchronous>, transform_indices = @transform_4, window_bounds = array<i64: 8, 1>}, {pipeline_mode = #tpu.pipeline_mode<synchronous>, transform_indices = @transform_5, window_bounds = array<i64: 2, 256>}, {transform_indices = @transform_6, window_bounds = array<i64: 8, 256>}]} {
    %c0 = arith.constant 0 : index
    %c0_0 = arith.constant 0 : index
    %0 = vector.load %arg1[%c0, %c0_0] : memref<8x256xf32, #tpu.memory_space<vmem>>, vector<8x256xf32>
    %c0_1 = arith.constant 0 : index
    %c0_2 = arith.constant 0 : index
    %1 = vector.load %arg6[%c0_1, %c0_2] : memref<2x256xf32, #tpu.memory_space<vmem>>, vector<2x256xf32>
    %c0_3 = arith.constant 0 : index
    %c0_4 = arith.constant 0 : index
    %2 = vector.load %arg2[%c0_3, %c0_4] : memref<16x24xf32, #tpu.memory_space<vmem>>, vector<16x24xf32>
    %c2_i32 = arith.constant 2 : i32
    %3 = tpu.dynamic_rotate %0 by %c2_i32 dim 1 : vector<8x256xf32>, i32 -> vector<8x256xf32>
    %4 = vector.extract_strided_slice %1 {offsets = [0, 0], sizes = [1, 256], strides = [1, 1]} : vector<2x256xf32> to vector<1x256xf32>
    %5 = vector.broadcast %4 : vector<1x256xf32> to vector<8x256xf32>
    %6 = arith.mulf %3, %5 : vector<8x256xf32>
    %c254_i32 = arith.constant 254 : i32
    %7 = tpu.dynamic_rotate %0 by %c254_i32 dim 1 : vector<8x256xf32>, i32 -> vector<8x256xf32>
    %8 = vector.extract_strided_slice %1 {offsets = [1, 0], sizes = [1, 256], strides = [1, 1]} : vector<2x256xf32> to vector<1x256xf32>
    %9 = vector.broadcast %8 : vector<1x256xf32> to vector<8x256xf32>
    %10 = arith.mulf %7, %9 : vector<8x256xf32>
    %11 = tpu.concatenate %6, %0, %10 in 0 : vector<8x256xf32>, vector<8x256xf32>, vector<8x256xf32> -> vector<24x256xf32>
    %cst = arith.constant dense<0.000000e+00> : vector<16x256xf32>
    %12 = tpu.matmul %2, %11, %cst {dimension_numbers = #tpu.dot_dimension_numbers<[1], [0], [0], [1], [0, 0, 1, 1], [], []>} : vector<16x24xf32>, vector<24x256xf32>, vector<16x256xf32> -> vector<16x256xf32>
    %c0_5 = arith.constant 0 : index
    %c0_6 = arith.constant 0 : index
    %13 = vector.load %arg3[%c0_5, %c0_6] : memref<16x1xf32, #tpu.memory_space<vmem>>, vector<16x1xf32>
    %14 = vector.broadcast %13 : vector<16x1xf32> to vector<16x256xf32>
    %15 = arith.addf %12, %14 : vector<16x256xf32>
    %16 = vector.extract_strided_slice %15 {offsets = [0, 0], sizes = [8, 256], strides = [1, 1]} : vector<16x256xf32> to vector<8x256xf32>
    %cst_7 = arith.constant 0.000000e+00 : f32
    %17 = vector.broadcast %cst_7 : f32 to vector<8x256xf32>
    %18 = arith.maximumf %16, %17 : vector<8x256xf32>
    %19 = vector.extract_strided_slice %15 {offsets = [8, 0], sizes = [8, 256], strides = [1, 1]} : vector<16x256xf32> to vector<8x256xf32>
    %c0_8 = arith.constant 0 : index
    %c0_9 = arith.constant 0 : index
    %20 = vector.load %arg4[%c0_8, %c0_9] : memref<8x24xf32, #tpu.memory_space<vmem>>, vector<8x24xf32>
    %c2_i32_10 = arith.constant 2 : i32
    %21 = tpu.dynamic_rotate %18 by %c2_i32_10 dim 1 : vector<8x256xf32>, i32 -> vector<8x256xf32>
    %22 = vector.extract_strided_slice %1 {offsets = [0, 0], sizes = [1, 256], strides = [1, 1]} : vector<2x256xf32> to vector<1x256xf32>
    %23 = vector.broadcast %22 : vector<1x256xf32> to vector<8x256xf32>
    %24 = arith.mulf %21, %23 : vector<8x256xf32>
    %c254_i32_11 = arith.constant 254 : i32
    %25 = tpu.dynamic_rotate %18 by %c254_i32_11 dim 1 : vector<8x256xf32>, i32 -> vector<8x256xf32>
    %26 = vector.extract_strided_slice %1 {offsets = [1, 0], sizes = [1, 256], strides = [1, 1]} : vector<2x256xf32> to vector<1x256xf32>
    %27 = vector.broadcast %26 : vector<1x256xf32> to vector<8x256xf32>
    %28 = arith.mulf %25, %27 : vector<8x256xf32>
    %29 = tpu.concatenate %24, %18, %28 in 0 : vector<8x256xf32>, vector<8x256xf32>, vector<8x256xf32> -> vector<24x256xf32>
    %cst_12 = arith.constant dense<0.000000e+00> : vector<8x256xf32>
    %30 = tpu.matmul %20, %29, %cst_12 {dimension_numbers = #tpu.dot_dimension_numbers<[1], [0], [0], [1], [0, 0, 1, 1], [], []>} : vector<8x24xf32>, vector<24x256xf32>, vector<8x256xf32> -> vector<8x256xf32>
    %c0_13 = arith.constant 0 : index
    %c0_14 = arith.constant 0 : index
    %31 = vector.load %arg5[%c0_13, %c0_14] : memref<8x1xf32, #tpu.memory_space<vmem>>, vector<8x1xf32>
    %32 = vector.broadcast %31 : vector<8x1xf32> to vector<8x256xf32>
    %33 = arith.addf %30, %32 : vector<8x256xf32>
    %cst_15 = arith.constant 0.000000e+00 : f32
    %34 = vector.broadcast %cst_15 : f32 to vector<8x256xf32>
    %35 = arith.maximumf %33, %34 : vector<8x256xf32>
    %36 = arith.addf %35, %19 : vector<8x256xf32>
    %c0_16 = arith.constant 0 : index
    %c0_17 = arith.constant 0 : index
    %37 = vector.load %arg7[%c0_16, %c0_17] : memref<8x256xf32, #tpu.memory_space<vmem>>, vector<8x256xf32>
    tpu.vector_store %arg7[%c0_16, %c0_17], %36 {strides = array<i32>} : memref<8x256xf32, #tpu.memory_space<vmem>>, vector<8x256xf32>,
    return
  }
  func.func @transform_0(%arg0: i32) -> (i32, i32) {
    %c0_i32 = arith.constant 0 : i32
    %c0_i32_0 = arith.constant 0 : i32
    return %c0_i32, %arg0 : i32, i32
  }
  func.func @transform_1(%arg0: i32) -> (i32, i32) {
    %c0_i32 = arith.constant 0 : i32
    %c0_i32_0 = arith.constant 0 : i32
    %c0_i32_1 = arith.constant 0 : i32
    return %c0_i32, %c0_i32_0 : i32, i32
  }
  func.func @transform_2(%arg0: i32) -> (i32, i32) {
    %c0_i32 = arith.constant 0 : i32
    %c0_i32_0 = arith.constant 0 : i32
    %c0_i32_1 = arith.constant 0 : i32
    return %c0_i32, %c0_i32_0 : i32, i32
  }
  func.func @transform_3(%arg0: i32) -> (i32, i32) {
    %c0_i32 = arith.constant 0 : i32
    %c0_i32_0 = arith.constant 0 : i32
    %c0_i32_1 = arith.constant 0 : i32
    return %c0_i32, %c0_i32_0 : i32, i32
  }
  func.func @transform_4(%arg0: i32) -> (i32, i32) {
    %c0_i32 = arith.constant 0 : i32
    %c0_i32_0 = arith.constant 0 : i32
    %c0_i32_1 = arith.constant 0 : i32
    return %c0_i32, %c0_i32_0 : i32, i32
  }
  func.func @transform_5(%arg0: i32) -> (i32, i32) {
    %c0_i32 = arith.constant 0 : i32
    %c0_i32_0 = arith.constant 0 : i32
    %c0_i32_1 = arith.constant 0 : i32
    return %c0_i32, %c0_i32_0 : i32, i32
  }
  func.func @transform_6(%arg0: i32) -> (i32, i32) {
    %c0_i32 = arith.constant 0 : i32
    %c0_i32_0 = arith.constant 0 : i32
    return %c0_i32, %arg0 : i32, i32
  }
}

</mosaic_0001>

<llo_original>
// kernel: tpu_custom_call.1
$region0: #{tpu_custom_call.1}
  #allocation0 [shape = 'u32[]', space=smem, size = 0x4, offset = 0x4, fixed_abs, tag = 'smem constant byte address 0x4 - core index']
  #allocation1 [shape = 'u32[144,128]{1,0:T(1,128)}', space=vmem, size = 0x12000, scoped, tag = 'internal scratch']
  %s0 = inlined_call_operand.vmem [shape: f32[8,256], index: 0, kind: input, shape index: {}]
  %s1 = inlined_call_operand.hbm [shape: f32[16,24], index: 1, kind: input, shape index: {}]
  %s2 = inlined_call_operand.vmem [shape: f32[16,1], index: 2, kind: input, shape index: {}]
  %s3 = inlined_call_operand.vmem [shape: f32[8,24], index: 3, kind: input, shape index: {}]
  %s4 = inlined_call_operand.vmem [shape: f32[8,1], index: 4, kind: input, shape index: {}]
  %s5 = inlined_call_operand.vmem [shape: f32[2,256], index: 5, kind: input, shape index: {}]
  %s6 = inlined_call_operand.hbm [shape: f32[8,256], index: 6, kind: output, shape index: {}]
  %s7 = sld [smem:[#allocation0]]
  $region38: #{tpu_custom_call.1} parent=0
    _
  %s9 = ssub.s32 1, %s7
  %s10 = scalar_select 0, %s9, %s7
  $region1: #{tpu_custom_call.1} parent=0
    #allocation2 [shape = 'u8[8192]{0}', space=vmem, size = 0x2000, scoped, tag = 'input window, operand 1, single buffered']
    #allocation3 [shape = 's32[1]{0}', space=sflag, size = 0x4, scoped, tag = 'scoped memory for tpu_custom_call.1']
    #allocation4 [shape = 's32[1]{0}', space=sflag, size = 0x4, scoped, tag = 'scoped memory for tpu_custom_call.1']
    #allocation5 [shape = 'u8[8192]{0}', space=vmem, size = 0x2000, scoped, tag = 'output window, operand 0, single buffered']
    %11 = vsyncpa [#allocation3], 0
    %12 = vsyncpa [#allocation4], 0
    // Predicated region
    $region2: #{tpu_custom_call.1} parent=1 // pred_check
      _
    $region3: #{tpu_custom_call.1} parent=1 // pred_check_branch
      %14 = sbr.rel (0) target = $region5
    $region4: #{tpu_custom_call.1} parent=1 // pred_region
      _
    $region5: #{tpu_custom_call.1} parent=1 // pred_fallthru
      _
    // Predicated region
    $region6: #{tpu_custom_call.1} parent=1 // pred_check
      _
    $region7: #{tpu_custom_call.1} parent=1 // pred_check_branch
      %16 = sbr.rel (0) target = $region9
    $region8: #{tpu_custom_call.1} parent=1 // pred_region
      %s18 = ssub.s32 256, 256
      %19 = vsyncadd [#allocation3], %s18
      %s20 = sshll.u32 [#allocation2], 4
      %s21 = int_to_ptr.vmem [resolvable:$true] %s20
      %26 = dma.hbm_to_vmem [thread:$0]  %s1, 256, %s21, [#allocation3], 128, 128, 8
    $region9: #{tpu_custom_call.1} parent=1 // pred_fallthru
      _
    // Predicated region
    $region10: #{tpu_custom_call.1} parent=1 // pred_check
      _
    $region11: #{tpu_custom_call.1} parent=1 // pred_check_branch
      %28 = sbr.rel (0) target = $region13
    $region12: #{tpu_custom_call.1} parent=1 // pred_region
      _
    $region13: #{tpu_custom_call.1} parent=1 // pred_fallthru
      _
    // Predicated region
    $region14: #{tpu_custom_call.1} parent=1 // pred_check
      _
    $region15: #{tpu_custom_call.1} parent=1 // pred_check_branch
      %30 = sbr.rel (0) target = $region17
    $region16: #{tpu_custom_call.1} parent=1 // pred_region
      _
    $region17: #{tpu_custom_call.1} parent=1 // pred_fallthru
      _
    // Predicated region
    $region18: #{tpu_custom_call.1} parent=1 // pred_check
      _
    $region19: #{tpu_custom_call.1} parent=1 // pred_check_branch
      %32 = sbr.rel (0) target = $region21
    $region20: #{tpu_custom_call.1} parent=1 // pred_region
      _
    $region21: #{tpu_custom_call.1} parent=1 // pred_fallthru
      _
    // Predicated region
    $region22: #{tpu_custom_call.1} parent=1 // pred_check
      _
    $region23: #{tpu_custom_call.1} parent=1 // pred_check_branch
      %34 = sbr.rel (0) target = $region25
    $region24: #{tpu_custom_call.1} parent=1 // pred_region
      _
    $region25: #{tpu_custom_call.1} parent=1 // pred_fallthru
      _
    // Predicated region
    $region26: #{tpu_custom_call.1} parent=1 // pred_check
      _
    $region27: #{tpu_custom_call.1} parent=1 // pred_check_branch
      %36 = sbr.rel (0) target = $region29
    $region28: #{tpu_custom_call.1} parent=1 // pred_region
      %37 = dma.done [#allocation3], 256
    $region29: #{tpu_custom_call.1} parent=1 // pred_fallthru
      _
    %v38 = vld [vmem:[%s0] sm:$0xff]
    %v39 = vld [vmem:[%s0 + $0x8] sm:$0xff]
    %v40 = vld [vmem:[%s5] sm:$0xf]
    %v41 = vld [vmem:[#allocation2] sm:$0xff]
    %v42 = vld [vmem:[#allocation2 + $0x8] sm:$0xff]
    %43 = vrot.lane.b32.xlu0 %v38, 2
    %v44 = vpop.permute.xlu0 %43
    %45 = vrot.lane.b32.xlu0 %v39, 2
    %v46 = vpop.permute.xlu0 %45
    %v47 = vlaneseq
    %v48 = vand.u32 %v47, 127
    %vm49 = vcmp.lt.s32.totalorder %v48, 2
    %v50 = vsel %vm49, %v44, %v46
    %v51 = vsel %vm49, %v46, %v44
    %v53 = vlaneseq
    %v54 = vshrl.u32 %v53, 7
    %v55 = vsub.s32 0, %v54
    %v56 = vrot.slane %v40, %v55
    %v57 = vlaneseq
    %v58 = vshrl.u32 %v57, 7
    %v59 = vsub.s32 2, %v58
    %v60 = vrot.slane %v40, %v59
    %v63 = vlaneseq
    %v64 = vshrl.u32 %v63, 7
    %v65 = vsub.s32 0, %v64
    %v66 = vrot.slane %v56, %v65
    %v67 = vlaneseq
    %v68 = vshrl.u32 %v67, 7
    %v69 = vsub.s32 0, %v68
    %v70 = vrot.slane %v60, %v69
    %v71 = vmul.f32 %v51, %v66
    %v72 = vmul.f32 %v50, %v70
    %73 = vrot.lane.b32.xlu0 %v38, 126
    %v74 = vpop.permute.xlu0 %73
    %75 = vrot.lane.b32.xlu0 %v39, 126
    %v76 = vpop.permute.xlu0 %75
    %vm77 = vcmp.lt.s32.totalorder %v48, 126
    %v78 = vsel %vm77, %v74, %v76
    %v79 = vsel %vm77, %v76, %v74
    %v80 = vlaneseq
    %v81 = vshrl.u32 %v80, 7
    %v82 = vsub.s32 1, %v81
    %v83 = vrot.slane %v40, %v82
    %v84 = vlaneseq
    %v85 = vshrl.u32 %v84, 7
    %v86 = vsub.s32 3, %v85
    %v87 = vrot.slane %v40, %v86
    %v90 = vlaneseq
    %v91 = vshrl.u32 %v90, 7
    %v92 = vsub.s32 1, %v91
    %v93 = vrot.slane %v83, %v92
    %v94 = vlaneseq
    %v95 = vshrl.u32 %v94, 7
    %v96 = vsub.s32 1, %v95
    %v97 = vrot.slane %v87, %v96
    %v98 = vmul.f32 %v78, %v93
    %v99 = vmul.f32 %v79, %v97
    %v100 = vld [vmem:[%s2] sm:$0xff]
    %v101 = vld [vmem:[%s2 + $0x8] sm:$0xff]
    %103 = vset.pattern.permute.xlu0 0
    %104 = vperm.xlu0 %103, %v100
    %v105 = vpop.permute.xlu0 %104
    %108 = vset.pattern.permute.xlu0 0
    %109 = vperm.xlu0 %108, %v101
    %v110 = vpop.permute.xlu0 %109
    %vm112 = vcmask 195584
    %v114 = vsel %vm112, %v41, 0
    %v117 = vsel %vm112, %v42, 0
    %119 = vmatprep.subr.mxu0 %v72
    %120 = vmatpush1.msra.mxu0 %v71
    %121 = vmatprep.subr.mxu0 %v39
    %122 = vmatpush1.msra.mxu0 %v38
    %123 = vmatprep.subr.mxu0 %v99
    %124 = vmatpush1.msra.mxu0 %v98
    %125 = vmatprep.subr.mxu0 0.0
    %126 = vmatpush1.msra.mxu0 0.0
    %127 = vmatprep.subr.mxu0 0.0
    %128 = vmatpush1.msra.mxu0 0.0
    %129 = vmatprep.subr.mxu0 0.0
    %130 = vmatpush1.msra.mxu0 0.0
    %131 = vmatprep.subr.mxu0 0.0
    %132 = vmatpush1.msra.mxu0 0.0
    %133 = vmatprep.subr.mxu0 0.0
    %134 = vmatpush1.msra.mxu0 0.0
    %135 = vmatprep.subr.mxu0 0.0
    %136 = vmatpush1.msra.mxu0 0.0
    %137 = vmatprep.subr.mxu0 0.0
    %138 = vmatpush1.msra.mxu0 0.0
    %139 = vmatprep.subr.mxu0 0.0
    %140 = vmatpush1.msra.mxu0 0.0
    %141 = vmatprep.subr.mxu0 0.0
    %142 = vmatpush1.msra.mxu0 0.0
    %143 = vmatprep.subr.mxu0 0.0
    %144 = vmatpush1.msra.mxu0 0.0
    %145 = vmatprep.subr.mxu0 0.0
    %146 = vmatpush1.msra.mxu0 0.0
    %147 = vmatprep.subr.mxu0 0.0
    %148 = vmatpush1.msra.mxu0 0.0
    %149 = vmatprep.subr.mxu0 0.0
    %150 = vmatpush1.msra.mxu0 0.0
    %151 = vmatprep.subr.mxu0 0.0
    %152 = vmatpush1.msra.mxu0 0.0
    %153 = vmatprep.subr.mxu0 0.0
    %154 = vmatpush1.msra.mxu0 0.0
    %155 = vmatprep.subr.mxu0 0.0
    %156 = vmatpush1.msra.mxu0 0.0
    %157 = vmatprep.subr.mxu0 0.0
    %158 = vmatpush1.msra.mxu0 0.0
    %159 = vmatprep.subr.mxu0 0.0
    %160 = vmatpush1.msra.mxu0 0.0
    %161 = vmatprep.subr.mxu0 0.0
    %162 = vmatpush1.msra.mxu0 0.0
    %163 = vmatprep.subr.mxu0 0.0
    %164 = vmatpush1.msra.mxu0 0.0
    %165 = vmatprep.subr.mxu0 0.0
    %166 = vmatpush1.msra.mxu0 0.0
    %167 = vmatprep.subr.mxu0 0.0
    %168 = vmatpush1.msra.mxu0 0.0
    %169 = vmatprep.subr.mxu0 0.0
    %170 = vmatpush1.msra.mxu0 0.0
    %171 = vmatprep.subr.mxu0 0.0
    %172 = vmatpush1.msra.mxu0 0.0
    %173 = vmatprep.subr.mxu0 0.0
    %174 = vmatpush1.msra.mxu0 0.0
    %175 = vmatprep.subr.mxu0 0.0
    %176 = vmatpush1.msra.mxu0 0.0
    %177 = vmatprep.subr.mxu0 0.0
    %178 = vmatpush1.msra.mxu0 0.0
    %179 = vmatprep.subr.mxu0 0.0
    %180 = vmatpush1.msra.mxu0 0.0
    %181 = vmatprep.subr.mxu0 0.0
    %182 = vmatpush1.msra.mxu0 0.0
    %183 = vmatprep.mubr.f32.mxu0 0.0
    %184 = vmatmul.mubr.f32.gmra.mrb[0].mxu0 %v114
    %v185 = vpop.f32.mrb[0].mxu0
    %v186 = vadd.f32 %v105, %v185
    %v187 = vpop.f32.mrb[0].mxu0
    %v188 = vadd.f32 %v105, %v187
    %189 = vmatprep.mubr.f32.mxu0 0.0
    %190 = vmatmul.mubr.f32.gmra.mrb[0].mxu0 %v117
    %v191 = vpop.f32.mrb[0].mxu0
    %v192 = vadd.f32 %v110, %v191
    %v193 = vpop.f32.mrb[0].mxu0
    %v194 = vadd.f32 %v110, %v193
    %195 = vdwg.mxu0
    %v196 = vmax.f32 %v186, 0.0
    %v197 = vmax.f32 %v188, 0.0
    %v198 = vld [vmem:[%s3] sm:$0xff]
    %199 = vrot.lane.b32.xlu0 %v196, 2
    %v200 = vpop.permute.xlu0 %199
    %201 = vrot.lane.b32.xlu0 %v197, 2
    %v202 = vpop.permute.xlu0 %201
    %v203 = vsel %vm49, %v200, %v202
    %v204 = vsel %vm49, %v202, %v200
    %v205 = vmul.f32 %v204, %v66
    %v206 = vmul.f32 %v203, %v70
    %207 = vrot.lane.b32.xlu0 %v196, 126
    %v208 = vpop.permute.xlu0 %207
    %209 = vrot.lane.b32.xlu0 %v197, 126
    %v210 = vpop.permute.xlu0 %209
    %v211 = vsel %vm77, %v208, %v210
    %v212 = vsel %vm77, %v210, %v208
    %v213 = vmul.f32 %v211, %v93
    %v214 = vmul.f32 %v212, %v97
    %v215 = vld [vmem:[%s4] sm:$0xff]
    %217 = vset.pattern.permute.xlu0 0
    %218 = vperm.xlu0 %217, %v215
    %v219 = vpop.permute.xlu0 %218
    %v222 = vsel %vm112, %v198, 0
    %224 = vmatprep.subr.mxu0 %v206
    %225 = vmatpush1.msra.mxu0 %v205
    %226 = vmatprep.subr.mxu0 %v197
    %227 = vmatpush1.msra.mxu0 %v196
    %228 = vmatprep.subr.mxu0 %v214
    %229 = vmatpush1.msra.mxu0 %v213
    %230 = vmatprep.subr.mxu0 0.0
    %231 = vmatpush1.msra.mxu0 0.0
    %232 = vmatprep.subr.mxu0 0.0
    %233 = vmatpush1.msra.mxu0 0.0
    %234 = vmatprep.subr.mxu0 0.0
    %235 = vmatpush1.msra.mxu0 0.0
    %236 = vmatprep.subr.mxu0 0.0
    %237 = vmatpush1.msra.mxu0 0.0
    %238 = vmatprep.subr.mxu0 0.0
    %239 = vmatpush1.msra.mxu0 0.0
    %240 = vmatprep.subr.mxu0 0.0
    %241 = vmatpush1.msra.mxu0 0.0
    %242 = vmatprep.subr.mxu0 0.0
    %243 = vmatpush1.msra.mxu0 0.0
    %244 = vmatprep.subr.mxu0 0.0
    %245 = vmatpush1.msra.mxu0 0.0
    %246 = vmatprep.subr.mxu0 0.0
    %247 = vmatpush1.msra.mxu0 0.0
    %248 = vmatprep.subr.mxu0 0.0
    %249 = vmatpush1.msra.mxu0 0.0
    %250 = vmatprep.subr.mxu0 0.0
    %251 = vmatpush1.msra.mxu0 0.0
    %252 = vmatprep.subr.mxu0 0.0
    %253 = vmatpush1.msra.mxu0 0.0
    %254 = vmatprep.subr.mxu0 0.0
    %255 = vmatpush1.msra.mxu0 0.0
    %256 = vmatprep.subr.mxu0 0.0
    %257 = vmatpush1.msra.mxu0 0.0
    %258 = vmatprep.subr.mxu0 0.0
    %259 = vmatpush1.msra.mxu0 0.0
    %260 = vmatprep.subr.mxu0 0.0
    %261 = vmatpush1.msra.mxu0 0.0
    %262 = vmatprep.subr.mxu0 0.0
    %263 = vmatpush1.msra.mxu0 0.0
    %264 = vmatprep.subr.mxu0 0.0
    %265 = vmatpush1.msra.mxu0 0.0
    %266 = vmatprep.subr.mxu0 0.0
    %267 = vmatpush1.msra.mxu0 0.0
    %268 = vmatprep.subr.mxu0 0.0
    %269 = vmatpush1.msra.mxu0 0.0
    %270 = vmatprep.subr.mxu0 0.0
    %271 = vmatpush1.msra.mxu0 0.0
    %272 = vmatprep.subr.mxu0 0.0
    %273 = vmatpush1.msra.mxu0 0.0
    %274 = vmatprep.subr.mxu0 0.0
    %275 = vmatpush1.msra.mxu0 0.0
    %276 = vmatprep.subr.mxu0 0.0
    %277 = vmatpush1.msra.mxu0 0.0
    %278 = vmatprep.subr.mxu0 0.0
    %279 = vmatpush1.msra.mxu0 0.0
    %280 = vmatprep.subr.mxu0 0.0
    %281 = vmatpush1.msra.mxu0 0.0
    %282 = vmatprep.subr.mxu0 0.0
    %283 = vmatpush1.msra.mxu0 0.0
    %284 = vmatprep.subr.mxu0 0.0
    %285 = vmatpush1.msra.mxu0 0.0
    %286 = vmatprep.subr.mxu0 0.0
    %287 = vmatpush1.msra.mxu0 0.0
    %288 = vmatprep.mubr.f32.mxu0 0.0
    %289 = vmatmul.mubr.f32.gmra.mrb[0].mxu0 %v222
    %v290 = vpop.f32.mrb[0].mxu0
    %v291 = vadd.f32 %v219, %v290
    %v292 = vpop.f32.mrb[0].mxu0
    %v293 = vadd.f32 %v219, %v292
    %294 = vdwg.mxu0
    %v295 = vmax.f32 %v291, 0.0
    %v296 = vmax.f32 %v293, 0.0
    %v297 = vadd.f32 %v295, %v192
    %v298 = vadd.f32 %v296, %v194
    %299 = vst [vmem:[#allocation5] sm:$0xff] %v297
    %300 = vst [vmem:[#allocation5 + $0x8] sm:$0xff] %v298
    // Predicated region
    $region30: #{tpu_custom_call.1} parent=1 // pred_check
      _
    $region31: #{tpu_custom_call.1} parent=1 // pred_check_branch
      %302 = sbr.rel (0) target = $region33
    $region32: #{tpu_custom_call.1} parent=1 // pred_region
      %s304 = ssub.s32 256, 256
      %305 = vsyncadd [#allocation4], %s304
      %s307 = sshll.u32 [#allocation5], 4
      %s308 = int_to_ptr.vmem [resolvable:$true] %s307
      %310 = dma.vmem_to_hbm [thread:$0]  %s308, 256, %s6, [#allocation4]
    $region33: #{tpu_custom_call.1} parent=1 // pred_fallthru
      _
    // Predicated region
    $region34: #{tpu_custom_call.1} parent=1 // pred_check
      _
    $region35: #{tpu_custom_call.1} parent=1 // pred_check_branch
      %312 = sbr.rel (0) target = $region37
    $region36: #{tpu_custom_call.1} parent=1 // pred_region
      %313 = dma.done [#allocation4], 256
    $region37: #{tpu_custom_call.1} parent=1 // pred_fallthru
      _
    %314 = vsyncpa [#allocation3], 1
    %315 = vsyncpa [#allocation4], 1

</llo_original>
